<compile_context>
chip_gen: v7x
topology: tpu7x:2x2x1
jax: 0.10.0
libtpu: 0.0.40
codegen_flags: <defaults>
</compile_context>

<pallas_src>
import jax
import jax.numpy as jnp
from jax.experimental import pallas as pl
from jax.experimental.pallas import tpu as pltpu

NUM_CLASSES = 4
_NUM_SPLITS = 2      # leading "parallel" grid axis -> both TensorCores on v7x, harmless on v5e/v6e
_ACC_LANES = 128     # lane-dense partials row: lane 0 = intersection, lane 1 = sum(x)


def _dice_partials_kernel(x_ref, t_ref, out_ref):
    # x_ref  : (NUM_CLASSES, TL) float    -- class-major view of the flat inputs
    # t_ref  : (1, TL)           int      -- target class ids for the TL pixels
    # out_ref: (1, 1, _ACC_LANES) f32     -- per-split partials; resident across the
    #                                        inner ("arbitrary") grid axis (accumulator)
    i = pl.program_id(1)

    @pl.when(i == 0)
    def _init():
        out_ref[...] = jnp.zeros_like(out_ref)

    x = x_ref[...].astype(jnp.float32)          # cast narrow inputs per block, accumulate f32
    t = t_ref[...].astype(jnp.int32)            # (1, TL), broadcasts over the class sublanes

    # One-hot never materialized: compare a sublane (class) iota against the broadcast
    # target row and select x where it matches.
    class_ids = jax.lax.broadcasted_iota(jnp.int32, x.shape, 0)     # (C, TL)
    inter = jnp.sum(jnp.where(class_ids == t, x, 0.0))
    sum_x = jnp.sum(x)

    # Scatter the two scalar partials into lanes 0 / 1 of the resident block using pure
    # vector ops (no scalar VMEM read-modify-write needed).
    lane = jax.lax.broadcasted_iota(jnp.int32, out_ref.shape, 2)
    update = jnp.where(lane == 0, inter, 0.0) + jnp.where(lane == 1, sum_x, 0.0)
    out_ref[...] += update


def dice_loss(inputs, targets, smooth=1.0, *, lane_tile=2048):
    """Pallas TPU implementation of DiceLoss.forward.

    inputs : float array with inputs.size == targets.size * NUM_CLASSES
             (e.g. NCHW predictions with C == 4). bf16/f32 accepted; f32 accumulation.
    targets: integer class-id array (e.g. (N, H, W)) with values in [0, NUM_CLASSES).
    """
    assert lane_tile % 128 == 0, "lane_tile must be a multiple of 128"
    if not jnp.issubdtype(inputs.dtype, jnp.floating):
        inputs = inputs.astype(jnp.float32)

    p = int(targets.size)
    assert inputs.size == p * NUM_CLASSES, (
        "inputs must have NUM_CLASSES elements per target element")

    # Flat pairing: inputs.view(-1)[k] <-> one_hot.view(-1)[k] == (targets_flat[k//4] == k%4).
    # Present it lane-dense: x_t[c, q] = inputs_flat[4q + c]  (class-major, shape (4, P)),
    # t_row[0, q] = targets_flat[q]  (shape (1, P)).
    x2d = inputs.reshape(-1).reshape(p, NUM_CLASSES)   # contiguous reshape (free)
    t1d = targets.reshape(-1)

    # Pad P so the (split, lane-tile) grid divides evenly. Padded inputs are zero, so they
    # contribute nothing to either sum; sum(one_hot) is replaced by the exact constant
    # float(p) below, so padded target values are irrelevant.
    bps = (p + _NUM_SPLITS * lane_tile - 1) // (_NUM_SPLITS * lane_tile)  # lane-tiles per split
    p_pad = _NUM_SPLITS * bps * lane_tile
    if p_pad != p:
        x2d = jnp.pad(x2d, ((0, p_pad - p), (0, 0)))
        t1d = jnp.pad(t1d, (0, p_pad - p))

    x_t = x2d.T                       # (NUM_CLASSES, p_pad), lane-dense
    t2d = t1d.reshape(1, p_pad)       # (1, p_pad), lane-dense

    partials = pl.pallas_call(
        _dice_partials_kernel,
        out_shape=jax.ShapeDtypeStruct((_NUM_SPLITS, 1, _ACC_LANES), jnp.float32),
        grid=(_NUM_SPLITS, bps),
        in_specs=[
            pl.BlockSpec((NUM_CLASSES, lane_tile), lambda c, i: (0, c * bps + i)),
            pl.BlockSpec((1, lane_tile), lambda c, i: (0, c * bps + i)),
        ],
        out_specs=pl.BlockSpec((1, 1, _ACC_LANES), lambda c, i: (c, 0, 0)),
        compiler_params=pltpu.CompilerParams(
            dimension_semantics=("parallel", "arbitrary"),
            vmem_limit_bytes=32 * 1024 * 1024,
        ),
    )(x_t, t2d)

    # Tiny scalar epilogue: combine the per-split partials and form the dice ratio.
    intersection = jnp.sum(partials[:, 0, 0])
    sum_x = jnp.sum(partials[:, 0, 1])
    smooth_f = jnp.float32(smooth)
    # sum(one_hot) == number of target elements, exactly (each pixel contributes one 1.0).
    dice = (2.0 * intersection + smooth_f) / (sum_x + jnp.float32(p) + smooth_f)
    return (1.0 - dice).astype(jnp.float32)


def _dice_loss_ref(inputs, targets, smooth=1.0):
    # Pure-JAX reference mirroring the PyTorch code literally.
    inputs_flat = inputs.astype(jnp.float32).reshape(-1)
    onehot_flat = jax.nn.one_hot(targets.astype(jnp.int32), NUM_CLASSES,
                                 dtype=jnp.float32).reshape(-1)
    intersection = jnp.sum(inputs_flat * onehot_flat)
    dice = (2.0 * intersection + smooth) / (
        jnp.sum(inputs_flat) + jnp.sum(onehot_flat) + smooth)
    return 1.0 - dice


if __name__ == "__main__":
    key = jax.random.PRNGKey(0)
    k1, k2 = jax.random.split(key)

    N, C, H, W = 2, NUM_CLASSES, 16, 16
    # Prediction-like inputs in [0, 1), NCHW.
    inputs = jax.random.uniform(k1, (N, C, H, W), dtype=jnp.float32)
    # Integer class labels in [0, 4).
    targets = jax.random.randint(k2, (N, H, W), 0, NUM_CLASSES, dtype=jnp.int32)

    ref = jax.block_until_ready(_dice_loss_ref(inputs, targets, smooth=1.0))

    # Default tile (exercises the padded, single-inner-step path).
    loss = jax.block_until_ready(dice_loss(inputs, targets, smooth=1.0))
    assert jnp.allclose(loss, ref, atol=1e-5, rtol=1e-5), (loss, ref)

    # Small tile (exercises multi-step accumulation on the "arbitrary" axis, no padding).
    loss_small = jax.block_until_ready(
        dice_loss(inputs, targets, smooth=1.0, lane_tile=128))
    assert jnp.allclose(loss_small, ref, atol=1e-5, rtol=1e-5), (loss_small, ref)

    print("KERNEL_OK")
</pallas_src>

<mosaic_0001>
module attributes {stable_mosaic.version = 11 : i64} {
  func.func @_dice_partials_kernel(%arg0: i32, %arg1: i32, %arg2: memref<4x2048xf32, #tpu.memory_space<vmem>>, %arg3: memref<1x2048xi32, #tpu.memory_space<vmem>>, %arg4: memref<1x1x128xf32, #tpu.memory_space<vmem>>) attributes {dimension_semantics = [#tpu.dimension_semantics<parallel>, #tpu.dimension_semantics<arbitrary>], iteration_bounds = array<i64: 2, 1>, scalar_prefetch = 0 : i64, scratch_operands = 0 : i64, tpu.core_type = #tpu.core_type<tc>, window_params = [{transform_indices = @transform_0, window_bounds = array<i64: 4, 2048>}, {transform_indices = @transform_1, window_bounds = array<i64: 1, 2048>}, {transform_indices = @transform_2, window_bounds = array<i64: 1, 1, 128>}]} {
    %c0_i32 = arith.constant 0 : i32
    %0 = arith.cmpi eq, %arg1, %c0_i32 : i32
    %1 = arith.extui %0 : i1 to i32
    %c0_i32_0 = arith.constant 0 : i32
    %2 = arith.cmpi ne, %1, %c0_i32_0 : i32
    scf.if %2 {
      %cst_15 = arith.constant 0.000000e+00 : f32
      %33 = vector.broadcast %cst_15 : f32 to vector<1x1x128xf32>
      %c0_16 = arith.constant 0 : index
      %c0_17 = arith.constant 0 : index
      %c0_18 = arith.constant 0 : index
      %34 = vector.load %arg4[%c0_16, %c0_17, %c0_18] : memref<1x1x128xf32, #tpu.memory_space<vmem>>, vector<1x1x128xf32>
      tpu.vector_store %arg4[%c0_16, %c0_17, %c0_18], %33 {strides = array<i32>} : memref<1x1x128xf32, #tpu.memory_space<vmem>>, vector<1x1x128xf32>,
    } else {
    }
    %c0 = arith.constant 0 : index
    %c0_1 = arith.constant 0 : index
    %3 = vector.load %arg2[%c0, %c0_1] : memref<4x2048xf32, #tpu.memory_space<vmem>>, vector<4x2048xf32>
    %c0_2 = arith.constant 0 : index
    %c0_3 = arith.constant 0 : index
    %4 = vector.load %arg3[%c0_2, %c0_3] : memref<1x2048xi32, #tpu.memory_space<vmem>>, vector<1x2048xi32>
    %5 = tpu.iota {dimensions = array<i32: 0>} : vector<4x2048xi32>
    %6 = vector.broadcast %4 : vector<1x2048xi32> to vector<4x2048xi32>
    %7 = arith.cmpi eq, %5, %6 : vector<4x2048xi32>
    %cst = arith.constant 0.000000e+00 : f32
    %8 = vector.broadcast %cst : f32 to vector<4x2048xf32>
    %9 = arith.select %7, %3, %8 : vector<4x2048xi1>, vector<4x2048xf32>
    %10 = vector.shape_cast %9 : vector<4x2048xf32> to vector<1x4x2048xf32>
    %cst_4 = arith.constant dense<0.000000e+00> : vector<1xf32>
    %11 = vector.multi_reduction <add>, %10, %cst_4 [1, 2] : vector<1x4x2048xf32> to vector<1xf32>
    %12 = vector.shape_cast %11 : vector<1xf32> to vector<1x1x1xf32>
    %13 = vector.extract %12[0, 0, 0] : f32 from vector<1x1x1xf32>
    %14 = vector.shape_cast %3 : vector<4x2048xf32> to vector<1x4x2048xf32>
    %cst_5 = arith.constant dense<0.000000e+00> : vector<1xf32>
    %15 = vector.multi_reduction <add>, %14, %cst_5 [1, 2] : vector<1x4x2048xf32> to vector<1xf32>
    %16 = vector.shape_cast %15 : vector<1xf32> to vector<1x1x1xf32>
    %17 = vector.extract %16[0, 0, 0] : f32 from vector<1x1x1xf32>
    %18 = tpu.iota {dimensions = array<i32: 2>} : vector<1x1x128xi32>
    %c0_i32_6 = arith.constant 0 : i32
    %19 = vector.broadcast %c0_i32_6 : i32 to vector<1x1x128xi32>
    %20 = arith.cmpi eq, %18, %19 : vector<1x1x128xi32>
    %cst_7 = arith.constant 0.000000e+00 : f32
    %21 = vector.broadcast %13 : f32 to vector<1x1x128xf32>
    %22 = vector.broadcast %cst_7 : f32 to vector<1x1x128xf32>
    %23 = arith.select %20, %21, %22 : vector<1x1x128xi1>, vector<1x1x128xf32>
    %c1_i32 = arith.constant 1 : i32
    %24 = vector.broadcast %c1_i32 : i32 to vector<1x1x128xi32>
    %25 = arith.cmpi eq, %18, %24 : vector<1x1x128xi32>
    %cst_8 = arith.constant 0.000000e+00 : f32
    %26 = vector.broadcast %17 : f32 to vector<1x1x128xf32>
    %27 = vector.broadcast %cst_8 : f32 to vector<1x1x128xf32>
    %28 = arith.select %25, %26, %27 : vector<1x1x128xi1>, vector<1x1x128xf32>
    %29 = arith.addf %23, %28 : vector<1x1x128xf32>
    %c0_9 = arith.constant 0 : index
    %c0_10 = arith.constant 0 : index
    %c0_11 = arith.constant 0 : index
    %30 = vector.load %arg4[%c0_9, %c0_10, %c0_11] : memref<1x1x128xf32, #tpu.memory_space<vmem>>, vector<1x1x128xf32>
    %31 = arith.addf %30, %29 : vector<1x1x128xf32>
    %c0_12 = arith.constant 0 : index
    %c0_13 = arith.constant 0 : index
    %c0_14 = arith.constant 0 : index
    %32 = vector.load %arg4[%c0_12, %c0_13, %c0_14] : memref<1x1x128xf32, #tpu.memory_space<vmem>>, vector<1x1x128xf32>
    tpu.vector_store %arg4[%c0_12, %c0_13, %c0_14], %31 {strides = array<i32>} : memref<1x1x128xf32, #tpu.memory_space<vmem>>, vector<1x1x128xf32>,
    return
  }
  func.func @transform_0(%arg0: i32, %arg1: i32) -> (i32, i32) {
    %c1_i32 = arith.constant 1 : i32
    %0 = arith.muli %arg0, %c1_i32 : i32
    %1 = arith.addi %0, %arg1 : i32
    %c0_i32 = arith.constant 0 : i32
    %c0_i32_0 = arith.constant 0 : i32
    return %c0_i32, %1 : i32, i32
  }
  func.func @transform_1(%arg0: i32, %arg1: i32) -> (i32, i32) {
    %c1_i32 = arith.constant 1 : i32
    %0 = arith.muli %arg0, %c1_i32 : i32
    %1 = arith.addi %0, %arg1 : i32
    %c0_i32 = arith.constant 0 : i32
    %c0_i32_0 = arith.constant 0 : i32
    return %c0_i32, %1 : i32, i32
  }
  func.func @transform_2(%arg0: i32, %arg1: i32) -> (i32, i32, i32) {
    %c0_i32 = arith.constant 0 : i32
    %c0_i32_0 = arith.constant 0 : i32
    %c0_i32_1 = arith.constant 0 : i32
    return %arg0, %c0_i32, %c0_i32_0 : i32, i32, i32
  }
}

</mosaic_0001>

<llo_original>
// kernel: tpu_custom_call.1
$region0: #{tpu_custom_call.1}
  #allocation0 [shape = 'u32[]', space=smem, size = 0x4, offset = 0x4, fixed_abs, tag = 'smem constant byte address 0x4 - core index']
  #allocation1 [shape = 'u32[144,128]{1,0:T(1,128)}', space=vmem, size = 0x12000, scoped, tag = 'internal scratch']
  %s0 = inlined_call_operand.hbm [shape: f32[4,4096], index: 0, kind: input, shape index: {}]
  %s1 = inlined_call_operand.hbm [shape: s32[1,4096], index: 1, kind: input, shape index: {}]
  %s2 = inlined_call_operand.hbm [shape: f32[2,1,128], index: 2, kind: output, shape index: {}]
  %s3 = sld [smem:[#allocation0]]
  $region53: #{tpu_custom_call.1} parent=0
    _
  %s5 = ssub.s32 1, %s3
  %s6 = scalar_select 0, %s5, %s3
  $region1: #{tpu_custom_call.1} parent=0
    #allocation2 [shape = 'u8[65536]{0}', space=vmem, size = 0x10000, scoped, tag = 'input window, operand 0']
    #allocation3 [shape = 's32[2]{0}', space=sflag, size = 0x8, scoped, tag = 'scoped memory for tpu_custom_call.1']
    #allocation4 [shape = 's32[2]{0}', space=sflag, size = 0x8, scoped, tag = 'scoped memory for tpu_custom_call.1']
    #allocation5 [shape = 'u8[16384]{0}', space=vmem, size = 0x4000, scoped, tag = 'input window, operand 1']
    #allocation6 [shape = 's32[2]{0}', space=sflag, size = 0x8, scoped, tag = 'scoped memory for tpu_custom_call.1']
    #allocation7 [shape = 'u8[1024]{0}', space=vmem, size = 0x400, scoped, tag = 'output window, operand 0']
    %7 = vsyncpa [#allocation3], 0
    %s8 = scalar_lea.sflag [#allocation3], 1
    %9 = vsyncpa %s8, 0
    %10 = vsyncpa [#allocation6], 0
    %s11 = scalar_lea.sflag [#allocation6], 1
    %12 = vsyncpa %s11, 0
    %13 = vsyncpa [#allocation4], 0
    %s14 = scalar_lea.sflag [#allocation4], 1
    %15 = vsyncpa %s14, 0
    loop: start=0, step=1, limit=4
    $region2: #{tpu_custom_call.1} parent=1 // loop_pre_header
      _
    $region3: #{tpu_custom_call.1} parent=1 // loop_header
      %s17 = sphi 0, %s21
      %p18 = scmp.ge.s32.totalorder %s17, 4
      %s24 = sphi 0, %s36
      %s25 = sphi 0, %s32
      %s26 = sphi 0, %s24
      %s27 = sphi 0, %s25
      %s28 = sphi 0, %s26
      %s29 = sphi 0, %s27
      %s41 = sphi 0, %s43
      %s44 = sphi 0, %s41
      %s45 = sphi 0, %s44
      %s61 = sphi 0, %s45
      %s69 = sphi 0, %s71
      %s72 = sphi 0, %s69
      %s73 = sphi 0, %s72
      %s89 = sphi 0, %s73
      %s95 = sphi 0, %s97
      %s98 = sphi 0, %s95
      %s99 = sphi 0, %s98
      %s115 = sphi 0, %s99
    $region4: #{tpu_custom_call.1} parent=1 // loop_header_branch
      %20 = sbr.rel (%p18) target = $region8
    $region5: #{tpu_custom_call.1} parent=1 // loop_body
      %s22 = ssub.s32 %s17, 1
      %s23 = ssub.s32 %s17, 2
      %s30 = sadd.s32 1, %s25
      %p31 = scmp.ge.s32.totalorder %s30, 1
      %s32 = scalar_select %p31, 0, %s30
      %s33 = sadd.s32 1, %s24
      %s34 = scalar_select %p31, %s33, %s24
      %p35 = scmp.ge.s32.totalorder %s34, 2
      %s36 = scalar_select %p35, 0, %s34
      %s37 = sadd.s32 %s24, %s25
      %s38 = sadd.s32 %s36, %s32
      %s39 = ssub.s32 %s37, %s38
      %p40 = scmp.eq.s32.totalorder %s39, 0
      %s42 = sadd.s32 %s41, 1
      %s43 = scalar_select %p40, %s41, %s42
      %p46 = pneg %p40
      %p47 = scmp.eq.s32.totalorder %s17, 1
      %p48 = por %p46, %p47
      %p49 = scmp.ne.s32.totalorder %s41, %s44
      %p50 = scmp.eq.s32.totalorder %s17, 0
      %p51 = por %p49, %p50
      %p52 = scmp.ne.s32.totalorder %s41, %s44
      %p53 = scmp.eq.s32.totalorder %s22, 1
      %p54 = por %p52, %p53
      %p55 = scmp.ne.s32.totalorder %s44, %s45
      %p56 = scmp.eq.s32.totalorder %s22, 0
      %p57 = por %p55, %p56
      %p58 = scmp.ne.s32.totalorder %s44, %s45
      %p59 = scmp.eq.s32.totalorder %s23, 1
      %p60 = por %p58, %p59
      %p62 = scmp.ne.s32.totalorder %s45, %s61
      %p63 = scmp.eq.s32.totalorder %s23, 0
      %p64 = por %p62, %p63
      %s65 = sadd.s32 %s24, %s25
      %s66 = sadd.s32 %s36, %s32
      %s67 = ssub.s32 %s65, %s66
      %p68 = scmp.eq.s32.totalorder %s67, 0
      %s70 = sadd.s32 %s69, 1
      %s71 = scalar_select %p68, %s69, %s70
      %p74 = pneg %p68
      %p75 = scmp.eq.s32.totalorder %s17, 1
      %p76 = por %p74, %p75
      %p77 = scmp.ne.s32.totalorder %s69, %s72
      %p78 = scmp.eq.s32.totalorder %s17, 0
      %p79 = por %p77, %p78
      %p80 = scmp.ne.s32.totalorder %s69, %s72
      %p81 = scmp.eq.s32.totalorder %s22, 1
      %p82 = por %p80, %p81
      %p83 = scmp.ne.s32.totalorder %s72, %s73
      %p84 = scmp.eq.s32.totalorder %s22, 0
      %p85 = por %p83, %p84
      %p86 = scmp.ne.s32.totalorder %s72, %s73
      %p87 = scmp.eq.s32.totalorder %s23, 1
      %p88 = por %p86, %p87
      %p90 = scmp.ne.s32.totalorder %s73, %s89
      %p91 = scmp.eq.s32.totalorder %s23, 0
      %p92 = por %p90, %p91
      %s93 = ssub.s32 %s24, %s36
      %p94 = scmp.eq.s32.totalorder %s93, 0
      %s96 = sadd.s32 %s95, 1
      %s97 = scalar_select %p94, %s95, %s96
      %p100 = pneg %p94
      %p101 = scmp.eq.s32.totalorder %s17, 1
      %p102 = por %p100, %p101
      %p103 = scmp.ne.s32.totalorder %s95, %s98
      %p104 = scmp.eq.s32.totalorder %s17, 0
      %p105 = por %p103, %p104
      %p106 = scmp.ne.s32.totalorder %s95, %s98
      %p107 = scmp.eq.s32.totalorder %s22, 1
      %p108 = por %p106, %p107
      %p109 = scmp.ne.s32.totalorder %s98, %s99
      %p110 = scmp.eq.s32.totalorder %s22, 0
      %p111 = por %p109, %p110
      %p112 = scmp.ne.s32.totalorder %s98, %s99
      %p113 = scmp.eq.s32.totalorder %s23, 1
      %p114 = por %p112, %p113
      %p116 = scmp.ne.s32.totalorder %s99, %s115
      %p117 = scmp.eq.s32.totalorder %s23, 0
      %p118 = por %p116, %p117
      %p119 = scmp.le.s32.totalorder 1, %s17
      %p120 = scmp.lt.s32.totalorder %s17, 3
      %p121 = pnand %p119, %p120
      %p122 = pneg %p121
      // Predicated region
      $region9: #{tpu_custom_call.1} parent=5 // pred_check
        _
      $region10: #{tpu_custom_call.1} parent=5 // pred_check_branch
        %124 = sbr.rel (%p121) target = $region12
      $region11: #{tpu_custom_call.1} parent=5 // pred_region
        %s125 = ssub.s32 %s17, 1
      $region12: #{tpu_custom_call.1} parent=5 // pred_fallthru
        _
      %p126 = scmp.lt.s32.totalorder %s17, 2
      // Predicated region
      $region13: #{tpu_custom_call.1} parent=5 // pred_check
        %p127 = pneg %p126
      $region14: #{tpu_custom_call.1} parent=5 // pred_check_branch
        %129 = sbr.rel (%p127) target = $region16
      $region15: #{tpu_custom_call.1} parent=5 // pred_region
        // Predicated region
        $region17: #{tpu_custom_call.1} parent=15 // pred_check
          %p130 = pneg %p51
        $region18: #{tpu_custom_call.1} parent=15 // pred_check_branch
          %132 = sbr.rel (%p130) target = $region20
        $region19: #{tpu_custom_call.1} parent=15 // pred_region
          %s133 = sand.u32 %s41, 1
          %s134 = scalar_lea.sflag [#allocation3], %s133
          %s135 = sand.u32 %s41, 1
          %s136 = smul.addr %s135, 64
          %s137 = scalar_lea.vmem [#allocation2], %s136
          %s138 = sadd.s32 %s24, %s25
          %s139 = smul.u32 16, %s138
          %s141 = ssub.s32 1024, 1024
          %142 = vsyncadd %s134, %s141
          %s143 = smul.addr %s139, 64
          %s144 = scalar_lea.hbm %s0, %s143
          %s146 = sshll.u32 %s137, 4
          %s147 = int_to_ptr.vmem [resolvable:$true] %s146
          %149 = dma.hbm_to_vmem [thread:$0]  %s144, 1024, %s147, %s134
        $region20: #{tpu_custom_call.1} parent=15 // pred_fallthru
          _
        // Predicated region
        $region21: #{tpu_custom_call.1} parent=15 // pred_check
          %p150 = pneg %p79
        $region22: #{tpu_custom_call.1} parent=15 // pred_check_branch
          %152 = sbr.rel (%p150) target = $region24
        $region23: #{tpu_custom_call.1} parent=15 // pred_region
          %s153 = sand.u32 %s69, 1
          %s154 = scalar_lea.sflag [#allocation6], %s153
          %s155 = sand.u32 %s69, 1
          %s156 = smul.addr %s155, 16
          %s157 = scalar_lea.vmem [#allocation5], %s156
          %s158 = sadd.s32 %s24, %s25
          %s159 = smul.u32 16, %s158
          %s161 = ssub.s32 256, 256
          %162 = vsyncadd %s154, %s161
          %s163 = smul.addr %s159, 16
          %s164 = scalar_lea.hbm %s1, %s163
          %s166 = sshll.u32 %s157, 4
          %s167 = int_to_ptr.vmem [resolvable:$true] %s166
          %169 = dma.hbm_to_vmem [thread:$0]  %s164, 256, %s167, %s154
        $region24: #{tpu_custom_call.1} parent=15 // pred_fallthru
          _
      $region16: #{tpu_custom_call.1} parent=5 // pred_fallthru
        _
      %p170 = scmp.le.s32.totalorder 1, %s17
      %p171 = scmp.lt.s32.totalorder %s17, 3
      %p172 = pnand %p170, %p171
      %p173 = pneg %p172
      // Predicated region
      $region25: #{tpu_custom_call.1} parent=5 // pred_check
        _
      $region26: #{tpu_custom_call.1} parent=5 // pred_check_branch
        %175 = sbr.rel (%p172) target = $region28
      $region27: #{tpu_custom_call.1} parent=5 // pred_region
        %s176 = ssub.s32 %s17, 1
        %s177 = sand.u32 %s44, 1
        %s178 = scalar_lea.sflag [#allocation3], %s177
        %s179 = sand.u32 %s44, 1
        %s180 = smul.addr %s179, 64
        %s181 = scalar_lea.vmem [#allocation2], %s180
        // Predicated region
        $region29: #{tpu_custom_call.1} parent=27 // pred_check
          %p182 = pneg %p57
        $region30: #{tpu_custom_call.1} parent=27 // pred_check_branch
          %184 = sbr.rel (%p182) target = $region32
        $region31: #{tpu_custom_call.1} parent=27 // pred_region
          %185 = dma.done %s178, 1024
        $region32: #{tpu_custom_call.1} parent=27 // pred_fallthru
          _
        %s186 = sand.u32 %s72, 1
        %s187 = scalar_lea.sflag [#allocation6], %s186
        %s188 = sand.u32 %s72, 1
        %s189 = smul.addr %s188, 16
        %s190 = scalar_lea.vmem [#allocation5], %s189
        // Predicated region
        $region33: #{tpu_custom_call.1} parent=27 // pred_check
          %p191 = pneg %p85
        $region34: #{tpu_custom_call.1} parent=27 // pred_check_branch
          %193 = sbr.rel (%p191) target = $region36
        $region35: #{tpu_custom_call.1} parent=27 // pred_region
          %194 = dma.done %s187, 256
        $region36: #{tpu_custom_call.1} parent=27 // pred_fallthru
          _
        %s195 = sand.u32 %s44, 1
        %s196 = scalar_lea.sflag [#allocation3], %s195
        %s197 = sand.u32 %s44, 1
        %s198 = smul.addr %s197, 64
        %s199 = scalar_lea.vmem [#allocation2], %s198
        %p200 = pneg %p57
        %p201 = pneg %p54
        %s202 = sand.u32 %s72, 1
        %s203 = scalar_lea.sflag [#allocation6], %s202
        %s204 = sand.u32 %s72, 1
        %s205 = smul.addr %s204, 16
        %s206 = scalar_lea.vmem [#allocation5], %s205
        %p207 = pneg %p85
        %p208 = pneg %p82
        %p209 = pneg %p111
        %p210 = pneg %p108
        %s211 = sand.u32 %s98, 1
        %s212 = scalar_lea.sflag [#allocation4], %s211
        %s213 = sand.u32 %s98, 1
        %s214 = scalar_lea.vmem [#allocation7], %s213
        %s215 = sadd.s32 %s26, %s27
        %s216 = smul.u32 16, %s215
        %s217 = sadd.s32 %s26, %s27
        %s218 = smul.u32 16, %s217
        %p219 = scmp.eq.s32.totalorder %s27, 0
        // Predicated region
        $region37: #{tpu_custom_call.1} parent=27 // pred_check
          %p220 = pneg %p219
        $region38: #{tpu_custom_call.1} parent=27 // pred_check_branch
          %222 = sbr.rel (%p220) target = $region40
        $region39: #{tpu_custom_call.1} parent=27 // pred_region
          %223 = vst [vmem:[%s214] sm:$0x1] 0.0
        $region40: #{tpu_custom_call.1} parent=27 // pred_fallthru
          _
        %v224 = vld [vmem:[%s181] sm:$0xff]
        %v225 = vld [vmem:[%s181 + $0x8] sm:$0xff]
        %v226 = vld [vmem:[%s181 + $0x10] sm:$0xff]
        %v227 = vld [vmem:[%s181 + $0x18] sm:$0xff]
        %v228 = vld [vmem:[%s181 + $0x20] sm:$0xff]
        %v229 = vld [vmem:[%s181 + $0x28] sm:$0xff]
        %v230 = vld [vmem:[%s181 + $0x30] sm:$0xff]
        %v231 = vld [vmem:[%s181 + $0x38] sm:$0xff]
        %v232 = vld [vmem:[%s190] sm:$0xff]
        %v233 = vld [vmem:[%s190 + $0x8] sm:$0xff]
        %v234 = vlaneseq
        %v235 = vshrl.u32 %v234, 7
        %v236 = vlaneseq
        %v237 = vshrl.u32 %v236, 7
        %v238 = vsub.s32 0, %v237
        %v239 = vrot.slane %v232, %v238
        %v240 = vlaneseq
        %v241 = vshrl.u32 %v240, 7
        %v242 = vsub.s32 1, %v241
        %v243 = vrot.slane %v232, %v242
        %v244 = vlaneseq
        %v245 = vshrl.u32 %v244, 7
        %v246 = vsub.s32 2, %v245
        %v247 = vrot.slane %v232, %v246
        %v248 = vlaneseq
        %v249 = vshrl.u32 %v248, 7
        %v250 = vsub.s32 3, %v249
        %v251 = vrot.slane %v232, %v250
        %v252 = vlaneseq
        %v253 = vshrl.u32 %v252, 7
        %v254 = vsub.s32 4, %v253
        %v255 = vrot.slane %v232, %v254
        %v256 = vlaneseq
        %v257 = vshrl.u32 %v256, 7
        %v258 = vsub.s32 5, %v257
        %v259 = vrot.slane %v232, %v258
        %v260 = vlaneseq
        %v261 = vshrl.u32 %v260, 7
        %v262 = vsub.s32 6, %v261
        %v263 = vrot.slane %v232, %v262
        %v264 = vlaneseq
        %v265 = vshrl.u32 %v264, 7
        %v266 = vsub.s32 7, %v265
        %v267 = vrot.slane %v232, %v266
        %v268 = vlaneseq
        %v269 = vshrl.u32 %v268, 7
        %v270 = vsub.s32 0, %v269
        %v271 = vrot.slane %v233, %v270
        %v272 = vlaneseq
        %v273 = vshrl.u32 %v272, 7
        %v274 = vsub.s32 1, %v273
        %v275 = vrot.slane %v233, %v274
        %v276 = vlaneseq
        %v277 = vshrl.u32 %v276, 7
        %v278 = vsub.s32 2, %v277
        %v279 = vrot.slane %v233, %v278
        %v280 = vlaneseq
        %v281 = vshrl.u32 %v280, 7
        %v282 = vsub.s32 3, %v281
        %v283 = vrot.slane %v233, %v282
        %v284 = vlaneseq
        %v285 = vshrl.u32 %v284, 7
        %v286 = vsub.s32 4, %v285
        %v287 = vrot.slane %v233, %v286
        %v288 = vlaneseq
        %v289 = vshrl.u32 %v288, 7
        %v290 = vsub.s32 5, %v289
        %v291 = vrot.slane %v233, %v290
        %v292 = vlaneseq
        %v293 = vshrl.u32 %v292, 7
        %v294 = vsub.s32 6, %v293
        %v295 = vrot.slane %v233, %v294
        %v296 = vlaneseq
        %v297 = vshrl.u32 %v296, 7
        %v298 = vsub.s32 7, %v297
        %v299 = vrot.slane %v233, %v298
        %vm300 = vcmp.eq.s32.totalorder %v235, %v239
        %vm301 = vcmp.eq.s32.totalorder %v235, %v243
        %vm302 = vcmp.eq.s32.totalorder %v235, %v247
        %vm303 = vcmp.eq.s32.totalorder %v235, %v251
        %vm304 = vcmp.eq.s32.totalorder %v235, %v255
        %vm305 = vcmp.eq.s32.totalorder %v235, %v259
        %vm306 = vcmp.eq.s32.totalorder %v235, %v263
        %vm307 = vcmp.eq.s32.totalorder %v235, %v267
        %vm308 = vcmp.eq.s32.totalorder %v235, %v271
        %vm309 = vcmp.eq.s32.totalorder %v235, %v275
        %vm310 = vcmp.eq.s32.totalorder %v235, %v279
        %vm311 = vcmp.eq.s32.totalorder %v235, %v283
        %vm312 = vcmp.eq.s32.totalorder %v235, %v287
        %vm313 = vcmp.eq.s32.totalorder %v235, %v291
        %vm314 = vcmp.eq.s32.totalorder %v235, %v295
        %vm315 = vcmp.eq.s32.totalorder %v235, %v299
        %v324 = vcombine.high %v224, %v224
        %v325 = vcombine.high %v225, %v225
        %v326 = vcombine.high %v226, %v226
        %v327 = vcombine.high %v227, %v227
        %v328 = vcombine.high %v228, %v228
        %v329 = vcombine.high %v229, %v229
        %v330 = vcombine.high %v230, %v230
        %v331 = vcombine.high %v231, %v231
        %v340 = vsel %vm300, %v224, 0.0
        %v341 = vsel %vm301, %v324, 0.0
        %v342 = vsel %vm302, %v225, 0.0
        %v343 = vsel %vm303, %v325, 0.0
        %v344 = vsel %vm304, %v226, 0.0
        %v345 = vsel %vm305, %v326, 0.0
        %v346 = vsel %vm306, %v227, 0.0
        %v347 = vsel %vm307, %v327, 0.0
        %v348 = vsel %vm308, %v228, 0.0
        %v349 = vsel %vm309, %v328, 0.0
        %v350 = vsel %vm310, %v229, 0.0
        %v351 = vsel %vm311, %v329, 0.0
        %v352 = vsel %vm312, %v230, 0.0
        %v353 = vsel %vm313, %v330, 0.0
        %v354 = vsel %vm314, %v231, 0.0
        %v355 = vsel %vm315, %v331, 0.0
        %vm356 = vcmask 1043456
        %v357 = vsel %vm356, %v340, 0.0
        %v358 = vsel %vm356, %v341, 0.0
        %v359 = vadd.f32 %v357, %v358
        %v360 = vsel %vm356, %v342, 0.0
        %v361 = vadd.f32 %v359, %v360
        %v362 = vsel %vm356, %v343, 0.0
        %v363 = vadd.f32 %v361, %v362
        %v364 = vsel %vm356, %v344, 0.0
        %v365 = vadd.f32 %v363, %v364
        %v366 = vsel %vm356, %v345, 0.0
        %v367 = vadd.f32 %v365, %v366
        %v368 = vsel %vm356, %v346, 0.0
        %v369 = vadd.f32 %v367, %v368
        %v370 = vsel %vm356, %v347, 0.0
        %v371 = vadd.f32 %v369, %v370
        %v372 = vsel %vm356, %v348, 0.0
        %v373 = vadd.f32 %v371, %v372
        %v374 = vsel %vm356, %v349, 0.0
        %v375 = vadd.f32 %v373, %v374
        %v376 = vsel %vm356, %v350, 0.0
        %v377 = vadd.f32 %v375, %v376
        %v378 = vsel %vm356, %v351, 0.0
        %v379 = vadd.f32 %v377, %v378
        %v380 = vsel %vm356, %v352, 0.0
        %v381 = vadd.f32 %v379, %v380
        %v382 = vsel %vm356, %v353, 0.0
        %v383 = vadd.f32 %v381, %v382
        %v384 = vsel %vm356, %v354, 0.0
        %v385 = vadd.f32 %v383, %v384
        %v386 = vsel %vm356, %v355, 0.0
        %v387 = vadd.f32 %v385, %v386
        %388 = vadd.xlane.f32.xlu0 %v387
        %v389 = vpop.xlane.xlu0 %388
        %v390 = vrot.slane %v389, 4
        %v391 = vadd.f32 %v389, %v390
        %v392 = vrot.slane %v391, 2
        %v393 = vadd.f32 %v391, %v392
        %v394 = vrot.slane %v393, 1
        %v395 = vadd.f32 %v393, %v394
        %s396 = vtos %v395
        %v397 = vsel %vm356, %v224, 0.0
        %v398 = vsel %vm356, %v324, 0.0
        %v399 = vadd.f32 %v397, %v398
        %v400 = vsel %vm356, %v225, 0.0
        %v401 = vadd.f32 %v399, %v400
        %v402 = vsel %vm356, %v325, 0.0
        %v403 = vadd.f32 %v401, %v402
        %v404 = vsel %vm356, %v226, 0.0
        %v405 = vadd.f32 %v403, %v404
        %v406 = vsel %vm356, %v326, 0.0
        %v407 = vadd.f32 %v405, %v406
        %v408 = vsel %vm356, %v227, 0.0
        %v409 = vadd.f32 %v407, %v408
        %v410 = vsel %vm356, %v327, 0.0
        %v411 = vadd.f32 %v409, %v410
        %v412 = vsel %vm356, %v228, 0.0
        %v413 = vadd.f32 %v411, %v412
        %v414 = vsel %vm356, %v328, 0.0
        %v415 = vadd.f32 %v413, %v414
        %v416 = vsel %vm356, %v229, 0.0
        %v417 = vadd.f32 %v415, %v416
        %v418 = vsel %vm356, %v329, 0.0
        %v419 = vadd.f32 %v417, %v418
        %v420 = vsel %vm356, %v230, 0.0
        %v421 = vadd.f32 %v419, %v420
        %v422 = vsel %vm356, %v330, 0.0
        %v423 = vadd.f32 %v421, %v422
        %v424 = vsel %vm356, %v231, 0.0
        %v425 = vadd.f32 %v423, %v424
        %v426 = vsel %vm356, %v331, 0.0
        %v427 = vadd.f32 %v425, %v426
        %428 = vadd.xlane.f32.xlu0 %v427
        %v429 = vpop.xlane.xlu0 %428
        %v430 = vrot.slane %v429, 4
        %v431 = vadd.f32 %v429, %v430
        %v432 = vrot.slane %v431, 2
        %v433 = vadd.f32 %v431, %v432
        %v434 = vrot.slane %v433, 1
        %v435 = vadd.f32 %v433, %v434
        %s436 = vtos %v435
        %v437 = vlaneseq
        %v438 = vand.u32 %v437, 127
        %vm439 = vcmp.eq.s32.totalorder %v438, 0
        %v440 = vstv %s396
        %v441 = vsel %vm439, %v440, 0.0
        %vm442 = vcmp.eq.s32.totalorder %v438, 1
        %v443 = vstv %s436
        %v444 = vsel %vm442, %v443, 0.0
        %v445 = vadd.f32 %v441, %v444
        %v446 = vld [vmem:[%s214] sm:$0x1]
        %v447 = vadd.f32 %v446, %v445
        %448 = vst [vmem:[%s214] sm:$0x1] %v447
        %s449 = sand.u32 %s98, 1
        %s450 = scalar_lea.sflag [#allocation4], %s449
        %s451 = sand.u32 %s98, 1
        %s452 = scalar_lea.vmem [#allocation7], %s451
        // Predicated region
        $region41: #{tpu_custom_call.1} parent=27 // pred_check
          %p453 = pneg %p108
        $region42: #{tpu_custom_call.1} parent=27 // pred_check_branch
          %455 = sbr.rel (%p453) target = $region44
        $region43: #{tpu_custom_call.1} parent=27 // pred_region
          %s457 = ssub.s32 16, 16
          %458 = vsyncadd %s450, %s457
          %s459 = smul.addr %s26, 16
          %s460 = scalar_lea.hbm %s2, %s459
          %s462 = sshll.u32 %s452, 4
          %s463 = int_to_ptr.vmem [resolvable:$true] %s462
          %465 = dma.vmem_to_hbm [thread:$0]  %s463, 16, %s460, %s450
        $region44: #{tpu_custom_call.1} parent=27 // pred_fallthru
          _
      $region28: #{tpu_custom_call.1} parent=5 // pred_fallthru
        _
      %p466 = scmp.le.s32.totalorder 2, %s17
      // Predicated region
      $region45: #{tpu_custom_call.1} parent=5 // pred_check
        %p467 = pneg %p466
      $region46: #{tpu_custom_call.1} parent=5 // pred_check_branch
        %469 = sbr.rel (%p467) target = $region48
      $region47: #{tpu_custom_call.1} parent=5 // pred_region
        %s470 = ssub.s32 %s17, 2
        // Predicated region
        $region49: #{tpu_custom_call.1} parent=47 // pred_check
          %p471 = pneg %p114
        $region50: #{tpu_custom_call.1} parent=47 // pred_check_branch
          %473 = sbr.rel (%p471) target = $region52
        $region51: #{tpu_custom_call.1} parent=47 // pred_region
          %s474 = sand.u32 %s99, 1
          %s475 = scalar_lea.sflag [#allocation4], %s474
          %s476 = sand.u32 %s99, 1
          %s477 = scalar_lea.vmem [#allocation7], %s476
          %478 = dma.done %s475, 16
        $region52: #{tpu_custom_call.1} parent=47 // pred_fallthru
          _
      $region48: #{tpu_custom_call.1} parent=5 // pred_fallthru
        _
    $region6: #{tpu_custom_call.1} parent=1 // loop_footer
      %s21 = sadd.s32 1, %s17
    $region7: #{tpu_custom_call.1} parent=1 // loop_footer_branch
      %16 = sbr.rel target = $region3
    $region8: #{tpu_custom_call.1} parent=1 // loop_exit
      _
    %479 = vsyncpa [#allocation3], 1
    %s480 = scalar_lea.sflag [#allocation3], 1
    %481 = vsyncpa %s480, 1
    %482 = vsyncpa [#allocation6], 1
    %s483 = scalar_lea.sflag [#allocation6], 1
    %484 = vsyncpa %s483, 1
    %485 = vsyncpa [#allocation4], 1
    %s486 = scalar_lea.sflag [#allocation4], 1
    %487 = vsyncpa %s486, 1

</llo_original>
